<compile_context>
chip_gen: v6e
topology: v6e:2x2x1
jax: 0.10.0
libtpu: 0.0.40
codegen_flags: <defaults>
</compile_context>

<pallas_src>
import functools

import jax
import jax.numpy as jnp
from jax.experimental import pallas as pl
from jax.experimental.pallas import tpu as pltpu

# torch.nn.RMSNorm(eps=None) uses torch.finfo(dtype).eps
_EPS = float(jnp.finfo(jnp.float32).eps)


def _rmsnorm(x, g, eps=_EPS):
    return x * jax.lax.rsqrt(jnp.mean(x * x, axis=-1, keepdims=True) + eps) * g


# --------------------- kernel 1: RMSNorm1 + fused QKV projection ---------------------
def _rmsnorm_qkv_kernel(x_ref, g_ref, wq_ref, wk_ref, wv_ref,
                        q_ref, k_ref, v_ref, *, num_heads, scale):
    x = x_ref[0]                                              # (tr, E) f32
    xb = _rmsnorm(x, g_ref[...]).astype(jnp.bfloat16)
    # One lane-dense (tr,E)@(E,E) bf16 matmul per projection (f32 accumulate).
    # 1/sqrt(hs) is folded into q here instead of scaling every (tq,tk) score tile.
    q = jnp.dot(xb, wq_ref[...], preferred_element_type=jnp.float32) * scale
    k = jnp.dot(xb, wk_ref[...], preferred_element_type=jnp.float32)
    v = jnp.dot(xb, wv_ref[...], preferred_element_type=jnp.float32)
    hs = x.shape[1] // num_heads
    # Relayout to head-major (H, tr, hs) once, so the attention kernel's inner
    # loop works on head-batched tiles with no per-step slicing/transposes.
    for h in range(num_heads):
        sl = slice(h * hs, (h + 1) * hs)
        q_ref[0, h] = q[:, sl].astype(jnp.bfloat16)
        k_ref[0, h] = k[:, sl].astype(jnp.bfloat16)
        v_ref[0, h] = v[:, sl].astype(jnp.bfloat16)


# ------------- kernel 2: flash attention + output projection + residual -------------
def _flash_attn_kernel(x_ref, mask_ref, q_ref, k_ref, v_ref, wo_ref, o_ref,
                       m_sc, l_sc, acc_sc, *, num_heads):
    qi = pl.program_id(1)
    ki = pl.program_id(2)
    tq = q_ref.shape[2]
    tk = k_ref.shape[2]

    @pl.when(ki == 0)
    def _init():
        m_sc[...] = jnp.full(m_sc.shape, -jnp.inf, m_sc.dtype)
        l_sc[...] = jnp.zeros(l_sc.shape, l_sc.dtype)
        acc_sc[...] = jnp.zeros(acc_sc.shape, acc_sc.dtype)

    # Skip KV blocks that lie entirely above the causal diagonal for this q block.
    @pl.when(ki * tk <= qi * tq + (tq - 1))
    def _update():
        q = q_ref[0]                                          # (H, tq, hs) bf16
        k = k_ref[0]                                          # (H, tk, hs) bf16
        v = v_ref[0]                                          # (H, tk, hs) bf16
        s = jnp.einsum("hqd,hkd->hqk", q, k,
                       preferred_element_type=jnp.float32)    # (H, tq, tk) f32
        row = jax.lax.broadcasted_iota(jnp.int32, (tq, tk), 0) + qi * tq
        col = jax.lax.broadcasted_iota(jnp.int32, (tq, tk), 1) + ki * tk
        ok = (row >= col) & (mask_ref[0] != 0)                # causal & user mask
        s = jnp.where(ok[None, :, :], s, jnp.float32(-1e20))
        m_prev = m_sc[...]
        m_new = jnp.maximum(m_prev, s.max(axis=-1, keepdims=True))
        alpha = jnp.exp(m_prev - m_new)
        p = jnp.exp(s - m_new)                                # f32 softmax statistics
        l_sc[...] = alpha * l_sc[...] + p.sum(axis=-1, keepdims=True)
        acc_sc[...] = alpha * acc_sc[...] + jnp.einsum(
            "hqk,hkd->hqd", p.astype(v.dtype), v,
            preferred_element_type=jnp.float32)
        m_sc[...] = m_new

    @pl.when(ki == pl.num_programs(2) - 1)
    def _finalize():
        inv_l = pl.reciprocal(l_sc[...], approx=True)         # EUP, not a VALU divide
        o = (acc_sc[...] * inv_l).astype(jnp.bfloat16)        # (H, tq, hs)
        y = x_ref[0]                                          # residual, (tq, E) f32
        # Per-head output-projection accumulation (no concatenate of head outputs).
        for h in range(num_heads):
            y = y + jnp.dot(o[h], wo_ref[h], preferred_element_type=jnp.float32)
        o_ref[0] = y


# ------------------------ kernel 3: RMSNorm2 + FFN + residual ------------------------
def _rmsnorm_ffn_kernel(h_ref, g_ref, w1_ref, b1_ref, w2_ref, b2_ref, o_ref):
    h = h_ref[0]                                              # (tr, E) f32
    xb = _rmsnorm(h, g_ref[...]).astype(jnp.bfloat16)
    a = jnp.dot(xb, w1_ref[...], preferred_element_type=jnp.float32) + b1_ref[...]
    # TODO(synk): torch F.gelu defaults to the exact erf form; the tanh approximation
    # is used here (and in the in-script reference) since erf lowering is not guaranteed.
    a = jax.nn.gelu(a, approximate=True).astype(jnp.bfloat16)
    y = jnp.dot(a, w2_ref[...], preferred_element_type=jnp.float32) + b2_ref[...]
    y = jax.nn.gelu(y, approximate=True)
    o_ref[0] = h + y


# ------------------------------------ wrapper ---------------------------------------
def _pick_tile(dim, preferred):
    return preferred if (dim >= preferred and dim % preferred == 0) else dim


def decoder_layer_pallas(x, mask, params, *, num_heads, use_ffn=True,
                         row_tile=256, q_tile=256, kv_tile=512):
    """DecoderLayer forward (ffn=True branch) via three Pallas kernels."""
    if not use_ffn:
        # TODO(synk): MoE branch (ffn=False) needs data-dependent top-1 expert routing
        # (topk + scatter); not implemented as a Pallas kernel.
        raise NotImplementedError("MoE branch (ffn=False) not implemented")

    B, T, E = x.shape
    assert E % num_heads == 0
    H = num_heads
    hs = E // H

    # Tile sizes (test shapes fall back to full T).  v5e: prefer q_tile=128;
    # v6e can afford 256-512; v7x: keep total VMEM under 64 MiB.
    tr = _pick_tile(T, row_tile)
    tq = _pick_tile(T, q_tile)
    tk = _pick_tile(T, kv_tile)
    vmem_limit = 64 * 1024 * 1024     # <= physical VMEM on v5e/v6e/v7x

    bf = jnp.bfloat16
    # bf16 weights: halve HBM/VMEM traffic and feed the MXU at full rate.
    wq_b = params["wq_t"].astype(bf)
    wk_b = params["wk_t"].astype(bf)
    wv_b = params["wv_t"].astype(bf)
    wo_b = params["wo_t"].reshape(H, hs, E).astype(bf)        # head-major row blocks
    w1_b = params["w1_t"].astype(bf)
    w2_b = params["w2_t"].astype(bf)
    g1 = params["g1"].reshape(1, E).astype(jnp.float32)
    g2 = params["g2"].reshape(1, E).astype(jnp.float32)
    b1 = params["b1"].reshape(1, E).astype(jnp.float32)
    b2 = params["b2"].reshape(1, E).astype(jnp.float32)
    mask_i8 = (mask != 0).astype(jnp.int8)                    # 4x less mask traffic vs f32

    # ---- 1) RMSNorm1 + QKV projection -> (B, H, T, hs) bf16 ----
    q, k, v = pl.pallas_call(
        functools.partial(_rmsnorm_qkv_kernel, num_heads=H, scale=hs ** -0.5),
        out_shape=(
            jax.ShapeDtypeStruct((B, H, T, hs), bf),
            jax.ShapeDtypeStruct((B, H, T, hs), bf),
            jax.ShapeDtypeStruct((B, H, T, hs), bf),
        ),
        grid_spec=pltpu.PrefetchScalarGridSpec(
            num_scalar_prefetch=0,
            grid=(B, T // tr),
            in_specs=[
                pl.BlockSpec((1, tr, E), lambda b, r: (b, r, 0)),
                pl.BlockSpec((1, E), lambda b, r: (0, 0)),
                pl.BlockSpec((E, E), lambda b, r: (0, 0)),
                pl.BlockSpec((E, E), lambda b, r: (0, 0)),
                pl.BlockSpec((E, E), lambda b, r: (0, 0)),
            ],
            out_specs=[
                pl.BlockSpec((1, H, tr, hs), lambda b, r: (b, 0, r, 0)),
                pl.BlockSpec((1, H, tr, hs), lambda b, r: (b, 0, r, 0)),
                pl.BlockSpec((1, H, tr, hs), lambda b, r: (b, 0, r, 0)),
            ],
        ),
        compiler_params=pltpu.CompilerParams(
            dimension_semantics=("parallel", "parallel"),
            vmem_limit_bytes=vmem_limit),
    )(x, g1, wq_b, wk_b, wv_b)

    # ---- 2) flash attention (online softmax over KV tiles) + Wo + residual ----
    h1 = pl.pallas_call(
        functools.partial(_flash_attn_kernel, num_heads=H),
        out_shape=jax.ShapeDtypeStruct((B, T, E), jnp.float32),
        grid_spec=pltpu.PrefetchScalarGridSpec(
            num_scalar_prefetch=0,
            grid=(B, T // tq, T // tk),
            in_specs=[
                pl.BlockSpec((1, tq, E), lambda b, i, j: (b, i, 0)),         # x (residual)
                pl.BlockSpec((1, tq, tk), lambda b, i, j: (b, i, j)),        # mask int8
                pl.BlockSpec((1, H, tq, hs), lambda b, i, j: (b, 0, i, 0)),  # q
                pl.BlockSpec((1, H, tk, hs), lambda b, i, j: (b, 0, j, 0)),  # k
                pl.BlockSpec((1, H, tk, hs), lambda b, i, j: (b, 0, j, 0)),  # v
                pl.BlockSpec((H, hs, E), lambda b, i, j: (0, 0, 0)),         # Wo (head-major)
            ],
            out_specs=pl.BlockSpec((1, tq, E), lambda b, i, j: (b, i, 0)),
            scratch_shapes=[
                pltpu.VMEM((H, tq, 1), jnp.float32),    # running max
                pltpu.VMEM((H, tq, 1), jnp.float32),    # running denom
                pltpu.VMEM((H, tq, hs), jnp.float32),   # running output acc
            ],
        ),
        compiler_params=pltpu.CompilerParams(
            dimension_semantics=("parallel", "parallel", "arbitrary"),
            vmem_limit_bytes=vmem_limit),
    )(x, mask_i8, q, k, v, wo_b)

    # ---- 3) RMSNorm2 + FFN (Linear-GELU-Linear-GELU) + residual ----
    out = pl.pallas_call(
        _rmsnorm_ffn_kernel,
        out_shape=jax.ShapeDtypeStruct((B, T, E), jnp.float32),
        grid_spec=pltpu.PrefetchScalarGridSpec(
            num_scalar_prefetch=0,
            grid=(B, T // tr),
            in_specs=[
                pl.BlockSpec((1, tr, E), lambda b, r: (b, r, 0)),
                pl.BlockSpec((1, E), lambda b, r: (0, 0)),
                pl.BlockSpec((E, E), lambda b, r: (0, 0)),
                pl.BlockSpec((1, E), lambda b, r: (0, 0)),
                pl.BlockSpec((E, E), lambda b, r: (0, 0)),
                pl.BlockSpec((1, E), lambda b, r: (0, 0)),
            ],
            out_specs=pl.BlockSpec((1, tr, E), lambda b, r: (b, r, 0)),
        ),
        compiler_params=pltpu.CompilerParams(
            dimension_semantics=("parallel", "parallel"),
            vmem_limit_bytes=vmem_limit),
    )(h1, g2, w1_b, b1, w2_b, b2)

    return out


# ----------------------------- pure-JAX reference ------------------------------------
def decoder_layer_reference(x, mask, params, *, num_heads):
    """Mirrors the torch DecoderLayer (eval, ffn=True branch) with the same bf16
    MXU-input casts as the kernels (softmax / norms / residuals in f32)."""
    B, T, E = x.shape
    hs = E // num_heads
    bf, f32 = jnp.bfloat16, jnp.float32

    xb = _rmsnorm(x, params["g1"]).astype(bf)
    q = jnp.dot(xb, params["wq_t"].astype(bf), preferred_element_type=f32) * hs ** -0.5
    k = jnp.dot(xb, params["wk_t"].astype(bf), preferred_element_type=f32)
    v = jnp.dot(xb, params["wv_t"].astype(bf), preferred_element_type=f32)

    def split_heads(t):
        return t.reshape(B, T, num_heads, hs).transpose(0, 2, 1, 3).astype(bf)

    qh, kh, vh = split_heads(q), split_heads(k), split_heads(v)
    s = jnp.einsum("bhqd,bhkd->bhqk", qh, kh, preferred_element_type=f32)
    causal = jnp.tril(jnp.ones((T, T), dtype=bool))
    ok = (mask[:, None, :, :] != 0) & causal[None, None, :, :]
    s = jnp.where(ok, s, -1e20)
    p = jax.nn.softmax(s, axis=-1)
    o = jnp.einsum("bhqk,bhkd->bhqd", p.astype(bf), vh, preferred_element_type=f32)
    o = o.transpose(0, 2, 1, 3).reshape(B, T, E)
    h1 = x + jnp.dot(o.astype(bf), params["wo_t"].astype(bf), preferred_element_type=f32)

    x2 = _rmsnorm(h1, params["g2"]).astype(bf)
    a = jnp.dot(x2, params["w1_t"].astype(bf), preferred_element_type=f32) + params["b1"]
    a = jax.nn.gelu(a, approximate=True).astype(bf)
    y = jnp.dot(a, params["w2_t"].astype(bf), preferred_element_type=f32) + params["b2"]
    y = jax.nn.gelu(y, approximate=True)
    return h1 + y


if __name__ == "__main__":
    # Small shapes consistent with the module: (batch, seq, embed), heads | embed.
    B, T, E, H = 2, 8, 32, 4

    key = jax.random.PRNGKey(0)
    ks = jax.random.split(key, 11)
    sc = 1.0 / (E ** 0.5)

    x = jax.random.normal(ks[0], (B, T, E), dtype=jnp.float32)
    params = {
        # per-head q/k/v nn.Linear(E, hs, bias=False) weights packed as column blocks
        # of pre-transposed (E, E) matrices, so y = x @ W_t  (== torch x @ W.T).
        "g1": 1.0 + 0.1 * jax.random.normal(ks[1], (E,), dtype=jnp.float32),
        "wq_t": jax.random.normal(ks[2], (E, E), dtype=jnp.float32) * sc,
        "wk_t": jax.random.normal(ks[3], (E, E), dtype=jnp.float32) * sc,
        "wv_t": jax.random.normal(ks[4], (E, E), dtype=jnp.float32) * sc,
        "wo_t": jax.random.normal(ks[5], (E, E), dtype=jnp.float32) * sc,
        "g2": 1.0 + 0.1 * jax.random.normal(ks[6], (E,), dtype=jnp.float32),
        "w1_t": jax.random.normal(ks[7], (E, E), dtype=jnp.float32) * sc,
        "b1": 0.1 * jax.random.normal(ks[8], (E,), dtype=jnp.float32),
        "w2_t": jax.random.normal(ks[9], (E, E), dtype=jnp.float32) * sc,
        "b2": 0.1 * jax.random.normal(ks[10], (E,), dtype=jnp.float32),
    }

    # Padding-style mask: batch 1 masks out the last 2 key positions.
    mask = jnp.ones((B, T, T), dtype=jnp.float32)
    mask = mask.at[1, :, T - 2:].set(0.0)

    out = decoder_layer_pallas(x, mask, params, num_heads=H)
    out = jax.block_until_ready(out)

    ref = decoder_layer_reference(x, mask, params, num_heads=H)
    assert out.shape == (B, T, E)
    max_err = float(jnp.max(jnp.abs(out - ref)))
    assert jnp.allclose(out, ref, atol=3e-2, rtol=3e-2), f"mismatch vs reference, max|err|={max_err}"

    print("KERNEL_OK")
</pallas_src>

<mosaic_0001>
module attributes {stable_mosaic.version = 11 : i64} {
  func.func @_rmsnorm_qkv_kernel(%arg0: i32, %arg1: i32, %arg2: memref<1x8x32xf32, #tpu.memory_space<vmem>>, %arg3: memref<1x32xf32, #tpu.memory_space<vmem>>, %arg4: memref<32x32xbf16, #tpu.memory_space<vmem>>, %arg5: memref<32x32xbf16, #tpu.memory_space<vmem>>, %arg6: memref<32x32xbf16, #tpu.memory_space<vmem>>, %arg7: memref<1x4x8x8xbf16, #tpu.memory_space<vmem>>, %arg8: memref<1x4x8x8xbf16, #tpu.memory_space<vmem>>, %arg9: memref<1x4x8x8xbf16, #tpu.memory_space<vmem>>) attributes {dimension_semantics = [#tpu.dimension_semantics<parallel>, #tpu.dimension_semantics<parallel>], iteration_bounds = array<i64: 2, 1>, scalar_prefetch = 0 : i64, scratch_operands = 0 : i64, tpu.core_type = #tpu.core_type<tc>, window_params = [{transform_indices = @transform_0, window_bounds = array<i64: 1, 8, 32>}, {pipeline_mode = #tpu.pipeline_mode<synchronous>, transform_indices = @transform_1, window_bounds = array<i64: 1, 32>}, {pipeline_mode = #tpu.pipeline_mode<synchronous>, transform_indices = @transform_2, window_bounds = array<i64: 32, 32>}, {pipeline_mode = #tpu.pipeline_mode<synchronous>, transform_indices = @transform_3, window_bounds = array<i64: 32, 32>}, {pipeline_mode = #tpu.pipeline_mode<synchronous>, transform_indices = @transform_4, window_bounds = array<i64: 32, 32>}, {transform_indices = @transform_5, window_bounds = array<i64: 1, 4, 8, 8>}, {transform_indices = @transform_6, window_bounds = array<i64: 1, 4, 8, 8>}, {transform_indices = @transform_7, window_bounds = array<i64: 1, 4, 8, 8>}]} {
    %c0 = arith.constant 0 : index
    %c0_0 = arith.constant 0 : index
    %c0_1 = arith.constant 0 : index
    %0 = vector.load %arg2[%c0, %c0_0, %c0_1] : memref<1x8x32xf32, #tpu.memory_space<vmem>>, vector<1x8x32xf32>
    %1 = vector.shape_cast %0 : vector<1x8x32xf32> to vector<8x32xf32>
    %c0_2 = arith.constant 0 : index
    %c0_3 = arith.constant 0 : index
    %2 = vector.load %arg3[%c0_2, %c0_3] : memref<1x32xf32, #tpu.memory_space<vmem>>, vector<1x32xf32>
    %3 = arith.mulf %1, %1 : vector<8x32xf32>
    %cst = arith.constant dense<0.000000e+00> : vector<8xf32>
    %4 = vector.multi_reduction <add>, %3, %cst [1] : vector<8x32xf32> to vector<8xf32>
    %5 = vector.shape_cast %4 : vector<8xf32> to vector<8x1xf32>
    %cst_4 = arith.constant 3.200000e+01 : f32
    %6 = vector.broadcast %cst_4 : f32 to vector<8x1xf32>
    %7 = arith.divf %5, %6 : vector<8x1xf32>
    %cst_5 = arith.constant 1.1920929E-7 : f32
    %8 = vector.broadcast %cst_5 : f32 to vector<8x1xf32>
    %9 = arith.addf %7, %8 : vector<8x1xf32>
    %10 = math.rsqrt %9 : vector<8x1xf32>
    %11 = vector.broadcast %10 : vector<8x1xf32> to vector<8x32xf32>
    %12 = arith.mulf %1, %11 : vector<8x32xf32>
    %13 = vector.broadcast %2 : vector<1x32xf32> to vector<8x32xf32>
    %14 = arith.mulf %12, %13 : vector<8x32xf32>
    %15 = arith.truncf %14 : vector<8x32xf32> to vector<8x32xbf16>
    %c0_6 = arith.constant 0 : index
    %c0_7 = arith.constant 0 : index
    %16 = vector.load %arg4[%c0_6, %c0_7] : memref<32x32xbf16, #tpu.memory_space<vmem>>, vector<32x32xbf16>
    %cst_8 = arith.constant dense<0.000000e+00> : vector<8x32xf32>
    %17 = tpu.matmul %15, %16, %cst_8 {dimension_numbers = #tpu.dot_dimension_numbers<[1], [0], [0], [1], [0, 0, 1, 1], [], []>} : vector<8x32xbf16>, vector<32x32xbf16>, vector<8x32xf32> -> vector<8x32xf32>
    %cst_9 = arith.constant 0.353553385 : f32
    %18 = vector.broadcast %cst_9 : f32 to vector<8x32xf32>
    %19 = arith.mulf %17, %18 : vector<8x32xf32>
    %c0_10 = arith.constant 0 : index
    %c0_11 = arith.constant 0 : index
    %20 = vector.load %arg5[%c0_10, %c0_11] : memref<32x32xbf16, #tpu.memory_space<vmem>>, vector<32x32xbf16>
    %cst_12 = arith.constant dense<0.000000e+00> : vector<8x32xf32>
    %21 = tpu.matmul %15, %20, %cst_12 {dimension_numbers = #tpu.dot_dimension_numbers<[1], [0], [0], [1], [0, 0, 1, 1], [], []>} : vector<8x32xbf16>, vector<32x32xbf16>, vector<8x32xf32> -> vector<8x32xf32>
    %c0_13 = arith.constant 0 : index
    %c0_14 = arith.constant 0 : index
    %22 = vector.load %arg6[%c0_13, %c0_14] : memref<32x32xbf16, #tpu.memory_space<vmem>>, vector<32x32xbf16>
    %cst_15 = arith.constant dense<0.000000e+00> : vector<8x32xf32>
    %23 = tpu.matmul %15, %22, %cst_15 {dimension_numbers = #tpu.dot_dimension_numbers<[1], [0], [0], [1], [0, 0, 1, 1], [], []>} : vector<8x32xbf16>, vector<32x32xbf16>, vector<8x32xf32> -> vector<8x32xf32>
    %24 = vector.extract_strided_slice %19 {offsets = [0, 0], sizes = [8, 8], strides = [1, 1]} : vector<8x32xf32> to vector<8x8xf32>
    %25 = arith.truncf %24 : vector<8x8xf32> to vector<8x8xbf16>
    %c0_16 = arith.constant 0 : index
    %c0_17 = arith.constant 0 : index
    %c0_18 = arith.constant 0 : index
    %c0_19 = arith.constant 0 : index
    %26 = vector.load %arg7[%c0_16, %c0_17, %c0_18, %c0_19] : memref<1x4x8x8xbf16, #tpu.memory_space<vmem>>, vector<1x1x8x8xbf16>
    %27 = vector.shape_cast %26 : vector<1x1x8x8xbf16> to vector<8x8xbf16>
    %28 = vector.shape_cast %25 : vector<8x8xbf16> to vector<1x1x8x8xbf16>
    tpu.vector_store %arg7[%c0_16, %c0_17, %c0_18, %c0_19], %28 {strides = array<i32>} : memref<1x4x8x8xbf16, #tpu.memory_space<vmem>>, vector<1x1x8x8xbf16>,
    %29 = vector.extract_strided_slice %21 {offsets = [0, 0], sizes = [8, 8], strides = [1, 1]} : vector<8x32xf32> to vector<8x8xf32>
    %30 = arith.truncf %29 : vector<8x8xf32> to vector<8x8xbf16>
    %c0_20 = arith.constant 0 : index
    %c0_21 = arith.constant 0 : index
    %c0_22 = arith.constant 0 : index
    %c0_23 = arith.constant 0 : index
    %31 = vector.load %arg8[%c0_20, %c0_21, %c0_22, %c0_23] : memref<1x4x8x8xbf16, #tpu.memory_space<vmem>>, vector<1x1x8x8xbf16>
    %32 = vector.shape_cast %31 : vector<1x1x8x8xbf16> to vector<8x8xbf16>
    %33 = vector.shape_cast %30 : vector<8x8xbf16> to vector<1x1x8x8xbf16>
    tpu.vector_store %arg8[%c0_20, %c0_21, %c0_22, %c0_23], %33 {strides = array<i32>} : memref<1x4x8x8xbf16, #tpu.memory_space<vmem>>, vector<1x1x8x8xbf16>,
    %34 = vector.extract_strided_slice %23 {offsets = [0, 0], sizes = [8, 8], strides = [1, 1]} : vector<8x32xf32> to vector<8x8xf32>
    %35 = arith.truncf %34 : vector<8x8xf32> to vector<8x8xbf16>
    %c0_24 = arith.constant 0 : index
    %c0_25 = arith.constant 0 : index
    %c0_26 = arith.constant 0 : index
    %c0_27 = arith.constant 0 : index
    %36 = vector.load %arg9[%c0_24, %c0_25, %c0_26, %c0_27] : memref<1x4x8x8xbf16, #tpu.memory_space<vmem>>, vector<1x1x8x8xbf16>
    %37 = vector.shape_cast %36 : vector<1x1x8x8xbf16> to vector<8x8xbf16>
    %38 = vector.shape_cast %35 : vector<8x8xbf16> to vector<1x1x8x8xbf16>
    tpu.vector_store %arg9[%c0_24, %c0_25, %c0_26, %c0_27], %38 {strides = array<i32>} : memref<1x4x8x8xbf16, #tpu.memory_space<vmem>>, vector<1x1x8x8xbf16>,
    %39 = vector.extract_strided_slice %19 {offsets = [0, 8], sizes = [8, 8], strides = [1, 1]} : vector<8x32xf32> to vector<8x8xf32>
    %40 = arith.truncf %39 : vector<8x8xf32> to vector<8x8xbf16>
    %c0_28 = arith.constant 0 : index
    %c1 = arith.constant 1 : index
    %c0_29 = arith.constant 0 : index
    %c0_30 = arith.constant 0 : index
    %41 = vector.load %arg7[%c0_28, %c1, %c0_29, %c0_30] : memref<1x4x8x8xbf16, #tpu.memory_space<vmem>>, vector<1x1x8x8xbf16>
    %42 = vector.shape_cast %41 : vector<1x1x8x8xbf16> to vector<8x8xbf16>
    %43 = vector.shape_cast %40 : vector<8x8xbf16> to vector<1x1x8x8xbf16>
    tpu.vector_store %arg7[%c0_28, %c1, %c0_29, %c0_30], %43 {strides = array<i32>} : memref<1x4x8x8xbf16, #tpu.memory_space<vmem>>, vector<1x1x8x8xbf16>,
    %44 = vector.extract_strided_slice %21 {offsets = [0, 8], sizes = [8, 8], strides = [1, 1]} : vector<8x32xf32> to vector<8x8xf32>
    %45 = arith.truncf %44 : vector<8x8xf32> to vector<8x8xbf16>
    %c0_31 = arith.constant 0 : index
    %c1_32 = arith.constant 1 : index
    %c0_33 = arith.constant 0 : index
    %c0_34 = arith.constant 0 : index
    %46 = vector.load %arg8[%c0_31, %c1_32, %c0_33, %c0_34] : memref<1x4x8x8xbf16, #tpu.memory_space<vmem>>, vector<1x1x8x8xbf16>
    %47 = vector.shape_cast %46 : vector<1x1x8x8xbf16> to vector<8x8xbf16>
    %48 = vector.shape_cast %45 : vector<8x8xbf16> to vector<1x1x8x8xbf16>
    tpu.vector_store %arg8[%c0_31, %c1_32, %c0_33, %c0_34], %48 {strides = array<i32>} : memref<1x4x8x8xbf16, #tpu.memory_space<vmem>>, vector<1x1x8x8xbf16>,
    %49 = vector.extract_strided_slice %23 {offsets = [0, 8], sizes = [8, 8], strides = [1, 1]} : vector<8x32xf32> to vector<8x8xf32>
    %50 = arith.truncf %49 : vector<8x8xf32> to vector<8x8xbf16>
    %c0_35 = arith.constant 0 : index
    %c1_36 = arith.constant 1 : index
    %c0_37 = arith.constant 0 : index
    %c0_38 = arith.constant 0 : index
    %51 = vector.load %arg9[%c0_35, %c1_36, %c0_37, %c0_38] : memref<1x4x8x8xbf16, #tpu.memory_space<vmem>>, vector<1x1x8x8xbf16>
    %52 = vector.shape_cast %51 : vector<1x1x8x8xbf16> to vector<8x8xbf16>
    %53 = vector.shape_cast %50 : vector<8x8xbf16> to vector<1x1x8x8xbf16>
    tpu.vector_store %arg9[%c0_35, %c1_36, %c0_37, %c0_38], %53 {strides = array<i32>} : memref<1x4x8x8xbf16, #tpu.memory_space<vmem>>, vector<1x1x8x8xbf16>,
    %54 = vector.extract_strided_slice %19 {offsets = [0, 16], sizes = [8, 8], strides = [1, 1]} : vector<8x32xf32> to vector<8x8xf32>
    %55 = arith.truncf %54 : vector<8x8xf32> to vector<8x8xbf16>
    %c0_39 = arith.constant 0 : index
    %c2 = arith.constant 2 : index
    %c0_40 = arith.constant 0 : index
    %c0_41 = arith.constant 0 : index
    %56 = vector.load %arg7[%c0_39, %c2, %c0_40, %c0_41] : memref<1x4x8x8xbf16, #tpu.memory_space<vmem>>, vector<1x1x8x8xbf16>
    %57 = vector.shape_cast %56 : vector<1x1x8x8xbf16> to vector<8x8xbf16>
    %58 = vector.shape_cast %55 : vector<8x8xbf16> to vector<1x1x8x8xbf16>
    tpu.vector_store %arg7[%c0_39, %c2, %c0_40, %c0_41], %58 {strides = array<i32>} : memref<1x4x8x8xbf16, #tpu.memory_space<vmem>>, vector<1x1x8x8xbf16>,
    %59 = vector.extract_strided_slice %21 {offsets = [0, 16], sizes = [8, 8], strides = [1, 1]} : vector<8x32xf32> to vector<8x8xf32>
    %60 = arith.truncf %59 : vector<8x8xf32> to vector<8x8xbf16>
    %c0_42 = arith.constant 0 : index
    %c2_43 = arith.constant 2 : index
    %c0_44 = arith.constant 0 : index
    %c0_45 = arith.constant 0 : index
    %61 = vector.load %arg8[%c0_42, %c2_43, %c0_44, %c0_45] : memref<1x4x8x8xbf16, #tpu.memory_space<vmem>>, vector<1x1x8x8xbf16>
    %62 = vector.shape_cast %61 : vector<1x1x8x8xbf16> to vector<8x8xbf16>
    %63 = vector.shape_cast %60 : vector<8x8xbf16> to vector<1x1x8x8xbf16>
    tpu.vector_store %arg8[%c0_42, %c2_43, %c0_44, %c0_45], %63 {strides = array<i32>} : memref<1x4x8x8xbf16, #tpu.memory_space<vmem>>, vector<1x1x8x8xbf16>,
    %64 = vector.extract_strided_slice %23 {offsets = [0, 16], sizes = [8, 8], strides = [1, 1]} : vector<8x32xf32> to vector<8x8xf32>
    %65 = arith.truncf %64 : vector<8x8xf32> to vector<8x8xbf16>
    %c0_46 = arith.constant 0 : index
    %c2_47 = arith.constant 2 : index
    %c0_48 = arith.constant 0 : index
    %c0_49 = arith.constant 0 : index
    %66 = vector.load %arg9[%c0_46, %c2_47, %c0_48, %c0_49] : memref<1x4x8x8xbf16, #tpu.memory_space<vmem>>, vector<1x1x8x8xbf16>
    %67 = vector.shape_cast %66 : vector<1x1x8x8xbf16> to vector<8x8xbf16>
    %68 = vector.shape_cast %65 : vector<8x8xbf16> to vector<1x1x8x8xbf16>
    tpu.vector_store %arg9[%c0_46, %c2_47, %c0_48, %c0_49], %68 {strides = array<i32>} : memref<1x4x8x8xbf16, #tpu.memory_space<vmem>>, vector<1x1x8x8xbf16>,
    %69 = vector.extract_strided_slice %19 {offsets = [0, 24], sizes = [8, 8], strides = [1, 1]} : vector<8x32xf32> to vector<8x8xf32>
    %70 = arith.truncf %69 : vector<8x8xf32> to vector<8x8xbf16>
    %c0_50 = arith.constant 0 : index
    %c3 = arith.constant 3 : index
    %c0_51 = arith.constant 0 : index
    %c0_52 = arith.constant 0 : index
    %71 = vector.load %arg7[%c0_50, %c3, %c0_51, %c0_52] : memref<1x4x8x8xbf16, #tpu.memory_space<vmem>>, vector<1x1x8x8xbf16>
    %72 = vector.shape_cast %71 : vector<1x1x8x8xbf16> to vector<8x8xbf16>
    %73 = vector.shape_cast %70 : vector<8x8xbf16> to vector<1x1x8x8xbf16>
    tpu.vector_store %arg7[%c0_50, %c3, %c0_51, %c0_52], %73 {strides = array<i32>} : memref<1x4x8x8xbf16, #tpu.memory_space<vmem>>, vector<1x1x8x8xbf16>,
    %74 = vector.extract_strided_slice %21 {offsets = [0, 24], sizes = [8, 8], strides = [1, 1]} : vector<8x32xf32> to vector<8x8xf32>
    %75 = arith.truncf %74 : vector<8x8xf32> to vector<8x8xbf16>
    %c0_53 = arith.constant 0 : index
    %c3_54 = arith.constant 3 : index
    %c0_55 = arith.constant 0 : index
    %c0_56 = arith.constant 0 : index
    %76 = vector.load %arg8[%c0_53, %c3_54, %c0_55, %c0_56] : memref<1x4x8x8xbf16, #tpu.memory_space<vmem>>, vector<1x1x8x8xbf16>
    %77 = vector.shape_cast %76 : vector<1x1x8x8xbf16> to vector<8x8xbf16>
    %78 = vector.shape_cast %75 : vector<8x8xbf16> to vector<1x1x8x8xbf16>
    tpu.vector_store %arg8[%c0_53, %c3_54, %c0_55, %c0_56], %78 {strides = array<i32>} : memref<1x4x8x8xbf16, #tpu.memory_space<vmem>>, vector<1x1x8x8xbf16>,
    %79 = vector.extract_strided_slice %23 {offsets = [0, 24], sizes = [8, 8], strides = [1, 1]} : vector<8x32xf32> to vector<8x8xf32>
    %80 = arith.truncf %79 : vector<8x8xf32> to vector<8x8xbf16>
    %c0_57 = arith.constant 0 : index
    %c3_58 = arith.constant 3 : index
    %c0_59 = arith.constant 0 : index
    %c0_60 = arith.constant 0 : index
    %81 = vector.load %arg9[%c0_57, %c3_58, %c0_59, %c0_60] : memref<1x4x8x8xbf16, #tpu.memory_space<vmem>>, vector<1x1x8x8xbf16>
    %82 = vector.shape_cast %81 : vector<1x1x8x8xbf16> to vector<8x8xbf16>
    %83 = vector.shape_cast %80 : vector<8x8xbf16> to vector<1x1x8x8xbf16>
    tpu.vector_store %arg9[%c0_57, %c3_58, %c0_59, %c0_60], %83 {strides = array<i32>} : memref<1x4x8x8xbf16, #tpu.memory_space<vmem>>, vector<1x1x8x8xbf16>,
    return
  }
  func.func @transform_0(%arg0: i32, %arg1: i32) -> (i32, i32, i32) {
    %c0_i32 = arith.constant 0 : i32
    %c0_i32_0 = arith.constant 0 : i32
    return %arg0, %arg1, %c0_i32 : i32, i32, i32
  }
  func.func @transform_1(%arg0: i32, %arg1: i32) -> (i32, i32) {
    %c0_i32 = arith.constant 0 : i32
    %c0_i32_0 = arith.constant 0 : i32
    %c0_i32_1 = arith.constant 0 : i32
    return %c0_i32, %c0_i32_0 : i32, i32
  }
  func.func @transform_2(%arg0: i32, %arg1: i32) -> (i32, i32) {
    %c0_i32 = arith.constant 0 : i32
    %c0_i32_0 = arith.constant 0 : i32
    %c0_i32_1 = arith.constant 0 : i32
    return %c0_i32, %c0_i32_0 : i32, i32
  }
  func.func @transform_3(%arg0: i32, %arg1: i32) -> (i32, i32) {
    %c0_i32 = arith.constant 0 : i32
    %c0_i32_0 = arith.constant 0 : i32
    %c0_i32_1 = arith.constant 0 : i32
    return %c0_i32, %c0_i32_0 : i32, i32
  }
  func.func @transform_4(%arg0: i32, %arg1: i32) -> (i32, i32) {
    %c0_i32 = arith.constant 0 : i32
    %c0_i32_0 = arith.constant 0 : i32
    %c0_i32_1 = arith.constant 0 : i32
    return %c0_i32, %c0_i32_0 : i32, i32
  }
  func.func @transform_5(%arg0: i32, %arg1: i32) -> (i32, i32, i32, i32) {
    %c0_i32 = arith.constant 0 : i32
    %c0_i32_0 = arith.constant 0 : i32
    %c0_i32_1 = arith.constant 0 : i32
    return %arg0, %c0_i32, %arg1, %c0_i32_0 : i32, i32, i32, i32
  }
  func.func @transform_6(%arg0: i32, %arg1: i32) -> (i32, i32, i32, i32) {
    %c0_i32 = arith.constant 0 : i32
    %c0_i32_0 = arith.constant 0 : i32
    %c0_i32_1 = arith.constant 0 : i32
    return %arg0, %c0_i32, %arg1, %c0_i32_0 : i32, i32, i32, i32
  }
  func.func @transform_7(%arg0: i32, %arg1: i32) -> (i32, i32, i32, i32) {
    %c0_i32 = arith.constant 0 : i32
    %c0_i32_0 = arith.constant 0 : i32
    %c0_i32_1 = arith.constant 0 : i32
    return %arg0, %c0_i32, %arg1, %c0_i32_0 : i32, i32, i32, i32
  }
}

</mosaic_0001>

<llo_original>
// kernel: tpu_custom_call.1
$region0: #{tpu_custom_call.1}
  #allocation0 [shape = 'u32[]', space=smem, size = 0x4, offset = 0x4, fixed_abs, tag = 'smem constant byte address 0x4 - core index']
  #allocation1 [shape = 'u32[144,128]{1,0:T(1,128)}', space=vmem, size = 0x12000, scoped, tag = 'internal scratch']
  %s0 = inlined_call_operand.hbm [shape: f32[2,8,32], index: 0, kind: input, shape index: {}]
  %s1 = inlined_call_operand.vmem [shape: f32[1,32], index: 1, kind: input, shape index: {}]
  %s2 = inlined_call_operand.hbm [shape: bf16[32,32], index: 2, kind: input, shape index: {}]
  %s3 = inlined_call_operand.hbm [shape: bf16[32,32], index: 3, kind: input, shape index: {}]
  %s4 = inlined_call_operand.hbm [shape: bf16[32,32], index: 4, kind: input, shape index: {}]
  %s5 = inlined_call_operand.hbm [shape: bf16[2,4,8,8], index: 5, kind: output, shape index: {0}]
  %s6 = inlined_call_operand.hbm [shape: bf16[2,4,8,8], index: 6, kind: output, shape index: {1}]
  %s7 = inlined_call_operand.hbm [shape: bf16[2,4,8,8], index: 7, kind: output, shape index: {2}]
  %8 = xla_tuple %s5, %s6, %s7
  %s9 = sld [smem:[#allocation0]]
  $region85: #{tpu_custom_call.1} parent=0
    _
  %s11 = ssub.s32 1, %s9
  %s12 = scalar_select 0, %s11, %s9
  $region1: #{tpu_custom_call.1} parent=0
    #allocation2 [shape = 'u8[8192]{0}', space=vmem, size = 0x2000, scoped, tag = 'input window, operand 0']
    #allocation3 [shape = 's32[2]{0}', space=sflag, size = 0x8, scoped, tag = 'scoped memory for tpu_custom_call.1']
    #allocation4 [shape = 's32[2]{0}', space=sflag, size = 0x8, scoped, tag = 'scoped memory for tpu_custom_call.1']
    #allocation5 [shape = 'u8[8192]{0}', space=vmem, size = 0x2000, scoped, tag = 'input window, operand 2, single buffered']
    #allocation6 [shape = 's32[1]{0}', space=sflag, size = 0x4, scoped, tag = 'scoped memory for tpu_custom_call.1']
    #allocation7 [shape = 'u8[8192]{0}', space=vmem, size = 0x2000, scoped, tag = 'input window, operand 3, single buffered']
    #allocation8 [shape = 'u8[8192]{0}', space=vmem, size = 0x2000, scoped, tag = 'input window, operand 4, single buffered']
    #allocation9 [shape = 's32[1]{0}', space=sflag, size = 0x4, scoped, tag = 'scoped memory for tpu_custom_call.1']
    #allocation10 [shape = 'u8[16384]{0}', space=vmem, size = 0x4000, scoped, tag = 'output window, operand 0']
    #allocation11 [shape = 'u8[16384]{0}', space=vmem, size = 0x4000, scoped, tag = 'output window, operand 1']
    #allocation12 [shape = 's32[2]{0}', space=sflag, size = 0x8, scoped, tag = 'scoped memory for tpu_custom_call.1']
    #allocation13 [shape = 'u8[16384]{0}', space=vmem, size = 0x4000, scoped, tag = 'output window, operand 2']
    %13 = vsyncpa [#allocation3], 0
    %s14 = scalar_lea.sflag [#allocation3], 1
    %15 = vsyncpa %s14, 0
    %16 = vsyncpa [#allocation6], 0
    %17 = vsyncpa [#allocation9], 0
    %18 = vsyncpa [#allocation4], 0
    %s19 = scalar_lea.sflag [#allocation4], 1
    %20 = vsyncpa %s19, 0
    %21 = vsyncpa [#allocation12], 0
    %s22 = scalar_lea.sflag [#allocation12], 1
    %23 = vsyncpa %s22, 0
    loop: start=0, step=1, limit=4
    $region2: #{tpu_custom_call.1} parent=1 // loop_pre_header
      _
    $region3: #{tpu_custom_call.1} parent=1 // loop_header
      %s25 = sphi 0, %s29
      %p26 = scmp.ge.s32.totalorder %s25, 4
      %s32 = sphi 0, %s44
      %s33 = sphi 0, %s40
      %s34 = sphi 0, %s32
      %s35 = sphi 0, %s33
      %s36 = sphi 0, %s34
      %s37 = sphi 0, %s35
      %s49 = sphi 0, %s51
      %s52 = sphi 0, %s49
      %s53 = sphi 0, %s52
      %s69 = sphi 0, %s53
      %s73 = sphi 0, %s73
      %s75 = sphi 0, %s73
      %s76 = sphi 0, %s75
      %s90 = sphi 0, %s76
      %s94 = sphi 0, %s94
      %s96 = sphi 0, %s94
      %s97 = sphi 0, %s96
      %s111 = sphi 0, %s97
      %s115 = sphi 0, %s115
      %s117 = sphi 0, %s115
      %s118 = sphi 0, %s117
      %s132 = sphi 0, %s118
      %s136 = sphi 0, %s136
      %s138 = sphi 0, %s136
      %s139 = sphi 0, %s138
      %s153 = sphi 0, %s139
      %s161 = sphi 0, %s163
      %s164 = sphi 0, %s161
      %s165 = sphi 0, %s164
      %s181 = sphi 0, %s165
      %s189 = sphi 0, %s191
      %s192 = sphi 0, %s189
      %s193 = sphi 0, %s192
      %s209 = sphi 0, %s193
      %s217 = sphi 0, %s219
      %s220 = sphi 0, %s217
      %s221 = sphi 0, %s220
      %s237 = sphi 0, %s221
    $region4: #{tpu_custom_call.1} parent=1 // loop_header_branch
      %28 = sbr.rel (%p26) target = $region8
    $region5: #{tpu_custom_call.1} parent=1 // loop_body
      %s30 = ssub.s32 %s25, 1
      %s31 = ssub.s32 %s25, 2
      %s38 = sadd.s32 1, %s33
      %p39 = scmp.ge.s32.totalorder %s38, 1
      %s40 = scalar_select %p39, 0, %s38
      %s41 = sadd.s32 1, %s32
      %s42 = scalar_select %p39, %s41, %s32
      %p43 = scmp.ge.s32.totalorder %s42, 2
      %s44 = scalar_select %p43, 0, %s42
      %s45 = ssub.s32 %s32, %s44
      %s46 = ssub.s32 %s33, %s40
      %s47 = sor.u32 %s45, %s46
      %p48 = scmp.eq.s32.totalorder %s47, 0
      %s50 = sadd.s32 %s49, 1
      %s51 = scalar_select %p48, %s49, %s50
      %p54 = pneg %p48
      %p55 = scmp.eq.s32.totalorder %s25, 1
      %p56 = por %p54, %p55
      %p57 = scmp.ne.s32.totalorder %s49, %s52
      %p58 = scmp.eq.s32.totalorder %s25, 0
      %p59 = por %p57, %p58
      %p60 = scmp.ne.s32.totalorder %s49, %s52
      %p61 = scmp.eq.s32.totalorder %s30, 1
      %p62 = por %p60, %p61
      %p63 = scmp.ne.s32.totalorder %s52, %s53
      %p64 = scmp.eq.s32.totalorder %s30, 0
      %p65 = por %p63, %p64
      %p66 = scmp.ne.s32.totalorder %s52, %s53
      %p67 = scmp.eq.s32.totalorder %s31, 1
      %p68 = por %p66, %p67
      %p70 = scmp.ne.s32.totalorder %s53, %s69
      %p71 = scmp.eq.s32.totalorder %s31, 0
      %p72 = por %p70, %p71
      %s74 = sadd.s32 %s73, 1
      %p77 = scmp.eq.s32.totalorder %s25, 1
      %p78 = scmp.ne.s32.totalorder %s73, %s75
      %p79 = scmp.eq.s32.totalorder %s25, 0
      %p80 = por %p78, %p79
      %p81 = scmp.ne.s32.totalorder %s73, %s75
      %p82 = scmp.eq.s32.totalorder %s30, 1
      %p83 = por %p81, %p82
      %p84 = scmp.ne.s32.totalorder %s75, %s76
      %p85 = scmp.eq.s32.totalorder %s30, 0
      %p86 = por %p84, %p85
      %p87 = scmp.ne.s32.totalorder %s75, %s76
      %p88 = scmp.eq.s32.totalorder %s31, 1
      %p89 = por %p87, %p88
      %p91 = scmp.ne.s32.totalorder %s76, %s90
      %p92 = scmp.eq.s32.totalorder %s31, 0
      %p93 = por %p91, %p92
      %s95 = sadd.s32 %s94, 1
      %p98 = scmp.eq.s32.totalorder %s25, 1
      %p99 = scmp.ne.s32.totalorder %s94, %s96
      %p100 = scmp.eq.s32.totalorder %s25, 0
      %p101 = por %p99, %p100
      %p102 = scmp.ne.s32.totalorder %s94, %s96
      %p103 = scmp.eq.s32.totalorder %s30, 1
      %p104 = por %p102, %p103
      %p105 = scmp.ne.s32.totalorder %s96, %s97
      %p106 = scmp.eq.s32.totalorder %s30, 0
      %p107 = por %p105, %p106
      %p108 = scmp.ne.s32.totalorder %s96, %s97
      %p109 = scmp.eq.s32.totalorder %s31, 1
      %p110 = por %p108, %p109
      %p112 = scmp.ne.s32.totalorder %s97, %s111
      %p113 = scmp.eq.s32.totalorder %s31, 0
      %p114 = por %p112, %p113
      %s116 = sadd.s32 %s115, 1
      %p119 = scmp.eq.s32.totalorder %s25, 1
      %p120 = scmp.ne.s32.totalorder %s115, %s117
      %p121 = scmp.eq.s32.totalorder %s25, 0
      %p122 = por %p120, %p121
      %p123 = scmp.ne.s32.totalorder %s115, %s117
      %p124 = scmp.eq.s32.totalorder %s30, 1
      %p125 = por %p123, %p124
      %p126 = scmp.ne.s32.totalorder %s117, %s118
      %p127 = scmp.eq.s32.totalorder %s30, 0
      %p128 = por %p126, %p127
      %p129 = scmp.ne.s32.totalorder %s117, %s118
      %p130 = scmp.eq.s32.totalorder %s31, 1
      %p131 = por %p129, %p130
      %p133 = scmp.ne.s32.totalorder %s118, %s132
      %p134 = scmp.eq.s32.totalorder %s31, 0
      %p135 = por %p133, %p134
      %s137 = sadd.s32 %s136, 1
      %p140 = scmp.eq.s32.totalorder %s25, 1
      %p141 = scmp.ne.s32.totalorder %s136, %s138
      %p142 = scmp.eq.s32.totalorder %s25, 0
      %p143 = por %p141, %p142
      %p144 = scmp.ne.s32.totalorder %s136, %s138
      %p145 = scmp.eq.s32.totalorder %s30, 1
      %p146 = por %p144, %p145
      %p147 = scmp.ne.s32.totalorder %s138, %s139
      %p148 = scmp.eq.s32.totalorder %s30, 0
      %p149 = por %p147, %p148
      %p150 = scmp.ne.s32.totalorder %s138, %s139
      %p151 = scmp.eq.s32.totalorder %s31, 1
      %p152 = por %p150, %p151
      %p154 = scmp.ne.s32.totalorder %s139, %s153
      %p155 = scmp.eq.s32.totalorder %s31, 0
      %p156 = por %p154, %p155
      %s157 = ssub.s32 %s32, %s44
      %s158 = ssub.s32 %s33, %s40
      %s159 = sor.u32 %s157, %s158
      %p160 = scmp.eq.s32.totalorder %s159, 0
      %s162 = sadd.s32 %s161, 1
      %s163 = scalar_select %p160, %s161, %s162
      %p166 = pneg %p160
      %p167 = scmp.eq.s32.totalorder %s25, 1
      %p168 = por %p166, %p167
      %p169 = scmp.ne.s32.totalorder %s161, %s164
      %p170 = scmp.eq.s32.totalorder %s25, 0
      %p171 = por %p169, %p170
      %p172 = scmp.ne.s32.totalorder %s161, %s164
      %p173 = scmp.eq.s32.totalorder %s30, 1
      %p174 = por %p172, %p173
      %p175 = scmp.ne.s32.totalorder %s164, %s165
      %p176 = scmp.eq.s32.totalorder %s30, 0
      %p177 = por %p175, %p176
      %p178 = scmp.ne.s32.totalorder %s164, %s165
      %p179 = scmp.eq.s32.totalorder %s31, 1
      %p180 = por %p178, %p179
      %p182 = scmp.ne.s32.totalorder %s165, %s181
      %p183 = scmp.eq.s32.totalorder %s31, 0
      %p184 = por %p182, %p183
      %s185 = ssub.s32 %s32, %s44
      %s186 = ssub.s32 %s33, %s40
      %s187 = sor.u32 %s185, %s186
      %p188 = scmp.eq.s32.totalorder %s187, 0
      %s190 = sadd.s32 %s189, 1
      %s191 = scalar_select %p188, %s189, %s190
      %p194 = pneg %p188
      %p195 = scmp.eq.s32.totalorder %s25, 1
      %p196 = por %p194, %p195
      %p197 = scmp.ne.s32.totalorder %s189, %s192
      %p198 = scmp.eq.s32.totalorder %s25, 0
      %p199 = por %p197, %p198
      %p200 = scmp.ne.s32.totalorder %s189, %s192
      %p201 = scmp.eq.s32.totalorder %s30, 1
      %p202 = por %p200, %p201
      %p203 = scmp.ne.s32.totalorder %s192, %s193
      %p204 = scmp.eq.s32.totalorder %s30, 0
      %p205 = por %p203, %p204
      %p206 = scmp.ne.s32.totalorder %s192, %s193
      %p207 = scmp.eq.s32.totalorder %s31, 1
      %p208 = por %p206, %p207
      %p210 = scmp.ne.s32.totalorder %s193, %s209
      %p211 = scmp.eq.s32.totalorder %s31, 0
      %p212 = por %p210, %p211
      %s213 = ssub.s32 %s32, %s44
      %s214 = ssub.s32 %s33, %s40
      %s215 = sor.u32 %s213, %s214
      %p216 = scmp.eq.s32.totalorder %s215, 0
      %s218 = sadd.s32 %s217, 1
      %s219 = scalar_select %p216, %s217, %s218
      %p222 = pneg %p216
      %p223 = scmp.eq.s32.totalorder %s25, 1
      %p224 = por %p222, %p223
      %p225 = scmp.ne.s32.totalorder %s217, %s220
      %p226 = scmp.eq.s32.totalorder %s25, 0
      %p227 = por %p225, %p226
      %p228 = scmp.ne.s32.totalorder %s217, %s220
      %p229 = scmp.eq.s32.totalorder %s30, 1
      %p230 = por %p228, %p229
      %p231 = scmp.ne.s32.totalorder %s220, %s221
      %p232 = scmp.eq.s32.totalorder %s30, 0
      %p233 = por %p231, %p232
      %p234 = scmp.ne.s32.totalorder %s220, %s221
      %p235 = scmp.eq.s32.totalorder %s31, 1
      %p236 = por %p234, %p235
      %p238 = scmp.ne.s32.totalorder %s221, %s237
      %p239 = scmp.eq.s32.totalorder %s31, 0
      %p240 = por %p238, %p239
      %p241 = scmp.le.s32.totalorder 1, %s25
      %p242 = scmp.lt.s32.totalorder %s25, 3
      %p243 = pnand %p241, %p242
      %p244 = pneg %p243
      // Predicated region
      $region9: #{tpu_custom_call.1} parent=5 // pred_check
        _
      $region10: #{tpu_custom_call.1} parent=5 // pred_check_branch
        %246 = sbr.rel (%p243) target = $region12
      $region11: #{tpu_custom_call.1} parent=5 // pred_region
        %s247 = ssub.s32 %s25, 1
        // Predicated region
        $region13: #{tpu_custom_call.1} parent=11 // pred_check
          %p248 = pneg %p86
        $region14: #{tpu_custom_call.1} parent=11 // pred_check_branch
          %250 = sbr.rel (%p248) target = $region16
        $region15: #{tpu_custom_call.1} parent=11 // pred_region
          _
        $region16: #{tpu_custom_call.1} parent=11 // pred_fallthru
          _
        // Predicated region
        $region17: #{tpu_custom_call.1} parent=11 // pred_check
          %p251 = pneg %p107
        $region18: #{tpu_custom_call.1} parent=11 // pred_check_branch
          %253 = sbr.rel (%p251) target = $region20
        $region19: #{tpu_custom_call.1} parent=11 // pred_region
          %s255 = ssub.s32 256, 256
          %256 = vsyncadd [#allocation6], %s255
          %s257 = sshll.u32 [#allocation5], 4
          %s258 = int_to_ptr.vmem [resolvable:$true] %s257
          %263 = dma.hbm_to_vmem [thread:$0]  %s2, 256, %s258, [#allocation6], 64, 64, 4
        $region20: #{tpu_custom_call.1} parent=11 // pred_fallthru
          _
        // Predicated region
        $region21: #{tpu_custom_call.1} parent=11 // pred_check
          %p264 = pneg %p128
        $region22: #{tpu_custom_call.1} parent=11 // pred_check_branch
          %266 = sbr.rel (%p264) target = $region24
        $region23: #{tpu_custom_call.1} parent=11 // pred_region
          %s268 = ssub.s32 256, 256
          %269 = vsyncadd [#allocation6], %s268
          %s270 = sshll.u32 [#allocation7], 4
          %s271 = int_to_ptr.vmem [resolvable:$true] %s270
          %276 = dma.hbm_to_vmem [thread:$0]  %s3, 256, %s271, [#allocation6], 64, 64, 4
        $region24: #{tpu_custom_call.1} parent=11 // pred_fallthru
          _
        // Predicated region
        $region25: #{tpu_custom_call.1} parent=11 // pred_check
          %p277 = pneg %p149
        $region26: #{tpu_custom_call.1} parent=11 // pred_check_branch
          %279 = sbr.rel (%p277) target = $region28
        $region27: #{tpu_custom_call.1} parent=11 // pred_region
          %s281 = ssub.s32 256, 256
          %282 = vsyncadd [#allocation9], %s281
          %s283 = sshll.u32 [#allocation8], 4
          %s284 = int_to_ptr.vmem [resolvable:$true] %s283
          %289 = dma.hbm_to_vmem [thread:$0]  %s4, 256, %s284, [#allocation9], 64, 64, 4
        $region28: #{tpu_custom_call.1} parent=11 // pred_fallthru
          _
      $region12: #{tpu_custom_call.1} parent=5 // pred_fallthru
        _
      %p290 = scmp.lt.s32.totalorder %s25, 2
      // Predicated region
      $region29: #{tpu_custom_call.1} parent=5 // pred_check
        %p291 = pneg %p290
      $region30: #{tpu_custom_call.1} parent=5 // pred_check_branch
        %293 = sbr.rel (%p291) target = $region32
      $region31: #{tpu_custom_call.1} parent=5 // pred_region
        // Predicated region
        $region33: #{tpu_custom_call.1} parent=31 // pred_check
          %p294 = pneg %p59
        $region34: #{tpu_custom_call.1} parent=31 // pred_check_branch
          %296 = sbr.rel (%p294) target = $region36
        $region35: #{tpu_custom_call.1} parent=31 // pred_region
          %s297 = sand.u32 %s49, 1
          %s298 = scalar_lea.sflag [#allocation3], %s297
          %s299 = sand.u32 %s49, 1
          %s300 = smul.addr %s299, 8
          %s301 = scalar_lea.vmem [#allocation2], %s300
          %s303 = ssub.s32 128, 128
          %304 = vsyncadd %s298, %s303
          %s305 = sadd.s32 %s33, %s32
          %s306 = smul.addr %s305, 128
          %s307 = scalar_lea.hbm %s0, %s306
          %s309 = sshll.u32 %s301, 4
          %s310 = int_to_ptr.vmem [resolvable:$true] %s309
          %312 = dma.hbm_to_vmem [thread:$0]  %s307, 128, %s310, %s298
        $region36: #{tpu_custom_call.1} parent=31 // pred_fallthru
          _
      $region32: #{tpu_custom_call.1} parent=5 // pred_fallthru
        _
      %p313 = scmp.le.s32.totalorder 1, %s25
      %p314 = scmp.lt.s32.totalorder %s25, 3
      %p315 = pnand %p313, %p314
      %p316 = pneg %p315
      // Predicated region
      $region37: #{tpu_custom_call.1} parent=5 // pred_check
        _
      $region38: #{tpu_custom_call.1} parent=5 // pred_check_branch
        %318 = sbr.rel (%p315) target = $region40
      $region39: #{tpu_custom_call.1} parent=5 // pred_region
        %s319 = ssub.s32 %s25, 1
        %s320 = sand.u32 %s52, 1
        %s321 = scalar_lea.sflag [#allocation3], %s320
        %s322 = sand.u32 %s52, 1
        %s323 = smul.addr %s322, 8
        %s324 = scalar_lea.vmem [#allocation2], %s323
        // Predicated region
        $region41: #{tpu_custom_call.1} parent=39 // pred_check
          %p325 = pneg %p65
        $region42: #{tpu_custom_call.1} parent=39 // pred_check_branch
          %327 = sbr.rel (%p325) target = $region44
        $region43: #{tpu_custom_call.1} parent=39 // pred_region
          %328 = dma.done %s321, 128
        $region44: #{tpu_custom_call.1} parent=39 // pred_fallthru
          _
        // Predicated region
        $region45: #{tpu_custom_call.1} parent=39 // pred_check
          %p329 = pneg %p107
        $region46: #{tpu_custom_call.1} parent=39 // pred_check_branch
          %331 = sbr.rel (%p329) target = $region48
        $region47: #{tpu_custom_call.1} parent=39 // pred_region
          %332 = dma.done [#allocation6], 256
        $region48: #{tpu_custom_call.1} parent=39 // pred_fallthru
          _
        // Predicated region
        $region49: #{tpu_custom_call.1} parent=39 // pred_check
          %p333 = pneg %p128
        $region50: #{tpu_custom_call.1} parent=39 // pred_check_branch
          %335 = sbr.rel (%p333) target = $region52
        $region51: #{tpu_custom_call.1} parent=39 // pred_region
          %336 = dma.done [#allocation6], 256
        $region52: #{tpu_custom_call.1} parent=39 // pred_fallthru
          _
        // Predicated region
        $region53: #{tpu_custom_call.1} parent=39 // pred_check
          %p337 = pneg %p149
        $region54: #{tpu_custom_call.1} parent=39 // pred_check_branch
          %339 = sbr.rel (%p337) target = $region56
        $region55: #{tpu_custom_call.1} parent=39 // pred_region
          %340 = dma.done [#allocation9], 256
        $region56: #{tpu_custom_call.1} parent=39 // pred_fallthru
          _
        %s341 = sand.u32 %s52, 1
        %s342 = scalar_lea.sflag [#allocation3], %s341
        %s343 = sand.u32 %s52, 1
        %s344 = smul.addr %s343, 8
        %s345 = scalar_lea.vmem [#allocation2], %s344
        %p346 = pneg %p65
        %p347 = pneg %p62
        %p348 = pneg %p86
        %p349 = pneg %p83
        %p350 = pneg %p107
        %p351 = pneg %p104
        %p352 = pneg %p128
        %p353 = pneg %p125
        %p354 = pneg %p149
        %p355 = pneg %p146
        %p356 = pneg %p177
        %p357 = pneg %p174
        %s358 = sand.u32 %s164, 1
        %s359 = scalar_lea.sflag [#allocation4], %s358
        %s360 = sand.u32 %s164, 1
        %s361 = smul.addr %s360, 16
        %s362 = scalar_lea.vmem [#allocation10], %s361
        %p363 = pneg %p205
        %p364 = pneg %p202
        %s365 = sand.u32 %s30, 1
        %s366 = scalar_lea.sflag [#allocation12], %s365
        %s367 = sand.u32 %s192, 1
        %s368 = smul.addr %s367, 16
        %s369 = scalar_lea.vmem [#allocation11], %s368
        %p370 = pneg %p233
        %p371 = pneg %p230
        %s372 = sand.u32 %s30, 1
        %s373 = scalar_lea.sflag [#allocation12], %s372
        %s374 = sand.u32 %s220, 1
        %s375 = smul.addr %s374, 16
        %s376 = scalar_lea.vmem [#allocation13], %s375
        %v378 = vld [vmem:[%s324] sm:$0xff]
        %v379 = vld [vmem:[%s1] sm:$0x1]
        %v380 = vmul.f32 %v378, %v378
        %vm381 = vcmask 261120
        %v382 = vsel %vm381, %v380, 0.0
        %383 = vadd.xlane.f32.xlu0 %v382
        %v384 = vpop.xlane.xlu0 %383
        %v385 = vrcp.pop 32.0
        %v386 = vmul.f32 %v384, %v385
        %v387 = vadd.f32 %v386, 1.1920929e-07
        %v388 = vrsqrt.pop %v387
        %v389 = vmul.f32 %v378, %v388
        %v391 = vlaneseq
        %v392 = vshrl.u32 %v391, 7
        %v393 = vsub.s32 0, %v392
        %v394 = vrot.slane %v379, %v393
        %v396 = vmul.f32 %v389, %v394
        %v397 = vpack.c.bf16 %v396, %v396
        %v398 = vld [vmem:[#allocation5] sm:$0xf]
        %v399 = vld [vmem:[#allocation5 + $0x4] sm:$0xf]
        %v400 = vld [vmem:[#allocation5 + $0x8] sm:$0xf]
        %v401 = vld [vmem:[#allocation5 + $0xc] sm:$0xf]
        %v406 = vunpack.c.l.b16 %v398
        %v407 = vunpack.c.l.b16 %v399
        %v408 = vunpack.c.l.b16 %v400
        %v409 = vunpack.c.l.b16 %v401
        %v410 = vpack.c.b16 %v407, %v406
        %v411 = vpack.c.b16 %v409, %v408
        %v415 = vsel %vm381, %v397, 0
        %417 = vmatprep.subr.bf16.mxu0 0
        %418 = vmatpush1.bf16.msra.mxu0 0
        %419 = vmatprep.subr.bf16.mxu0 0
        %420 = vmatpush1.bf16.msra.mxu0 0
        %421 = vmatprep.subr.bf16.mxu0 0
        %422 = vmatpush1.bf16.msra.mxu0 0
        %423 = vmatprep.subr.bf16.mxu0 0
        %424 = vmatpush1.bf16.msra.mxu0 0
        %425 = vmatprep.subr.bf16.mxu0 0
        %426 = vmatpush1.bf16.msra.mxu0 0
        %427 = vmatprep.subr.bf16.mxu0 0
        %428 = vmatpush1.bf16.msra.mxu0 0
        %429 = vmatprep.subr.bf16.mxu0 0
        %430 = vmatpush1.bf16.msra.mxu0 %v411
        %431 = vmatprep.subr.bf16.mxu0 0
        %432 = vmatpush1.bf16.msra.mxu0 %v410
        %433 = vmatprep.subr.bf16.mxu0 0
        %434 = vmatpush2.bf16.msra.mxu0 0
        %435 = vmatprep.subr.bf16.mxu0 0
        %436 = vmatpush2.bf16.msra.mxu0 0
        %437 = vmatprep.subr.bf16.mxu0 0
        %438 = vmatpush2.bf16.msra.mxu0 0
        %439 = vmatprep.subr.bf16.mxu0 0
        %440 = vmatpush2.bf16.msra.mxu0 0
        %441 = vmatprep.subr.bf16.mxu0 0
        %442 = vmatpush2.bf16.msra.mxu0 0
        %443 = vmatprep.subr.bf16.mxu0 0
        %444 = vmatpush2.bf16.msra.mxu0 0
        %445 = vmatprep.subr.bf16.mxu0 0
        %446 = vmatpush2.bf16.msra.mxu0 0
        %447 = vmatprep.subr.bf16.mxu0 0
        %448 = vmatpush2.bf16.msra.mxu0 0
        %449 = vmatprep.mubr.bf16.mxu0 0
        %450 = vmatmul.mubr.bf16.gmra.mxu0 %v415
        %v451 = vpop.f32.mrf.mxu0
        %v452 = vadd.f32 0.0, %v451
        %v453 = vpop.f32.mrf.mxu0
        %v454 = vpop.f32.mrf.mxu0
        %v455 = vpop.f32.mrf.mxu0
        %456 = vdwg.mxu0
        %v457 = vmul.f32 %v452, 0.35355338
        %v458 = vld [vmem:[#allocation7] sm:$0xf]
        %v459 = vld [vmem:[#allocation7 + $0x4] sm:$0xf]
        %v460 = vld [vmem:[#allocation7 + $0x8] sm:$0xf]
        %v461 = vld [vmem:[#allocation7 + $0xc] sm:$0xf]
        %v466 = vunpack.c.l.b16 %v458
        %v467 = vunpack.c.l.b16 %v459
        %v468 = vunpack.c.l.b16 %v460
        %v469 = vunpack.c.l.b16 %v461
        %v470 = vpack.c.b16 %v467, %v466
        %v471 = vpack.c.b16 %v469, %v468
        %474 = vmatprep.subr.bf16.mxu0 0
        %475 = vmatpush1.bf16.msra.mxu0 0
        %476 = vmatprep.subr.bf16.mxu0 0
        %477 = vmatpush1.bf16.msra.mxu0 0
        %478 = vmatprep.subr.bf16.mxu0 0
        %479 = vmatpush1.bf16.msra.mxu0 0
        %480 = vmatprep.subr.bf16.mxu0 0
        %481 = vmatpush1.bf16.msra.mxu0 0
        %482 = vmatprep.subr.bf16.mxu0 0
        %483 = vmatpush1.bf16.msra.mxu0 0
        %484 = vmatprep.subr.bf16.mxu0 0
        %485 = vmatpush1.bf16.msra.mxu0 0
        %486 = vmatprep.subr.bf16.mxu0 0
        %487 = vmatpush1.bf16.msra.mxu0 %v471
        %488 = vmatprep.subr.bf16.mxu0 0
        %489 = vmatpush1.bf16.msra.mxu0 %v470
        %490 = vmatprep.subr.bf16.mxu0 0
        %491 = vmatpush2.bf16.msra.mxu0 0
        %492 = vmatprep.subr.bf16.mxu0 0
        %493 = vmatpush2.bf16.msra.mxu0 0
        %494 = vmatprep.subr.bf16.mxu0 0
        %495 = vmatpush2.bf16.msra.mxu0 0
        %496 = vmatprep.subr.bf16.mxu0 0
        %497 = vmatpush2.bf16.msra.mxu0 0
        %498 = vmatprep.subr.bf16.mxu0 0
        %499 = vmatpush2.bf16.msra.mxu0 0
        %500 = vmatprep.subr.bf16.mxu0 0
        %501 = vmatpush2.bf16.msra.mxu0 0
        %502 = vmatprep.subr.bf16.mxu0 0
        %503 = vmatpush2.bf16.msra.mxu0 0
        %504 = vmatprep.subr.bf16.mxu0 0
        %505 = vmatpush2.bf16.msra.mxu0 0
        %506 = vmatprep.mubr.bf16.mxu0 0
        %507 = vmatmul.mubr.bf16.gmra.mxu0 %v415
        %v508 = vpop.f32.mrf.mxu0
        %v509 = vadd.f32 0.0, %v508
        %v510 = vpop.f32.mrf.mxu0
        %v511 = vpop.f32.mrf.mxu0
        %v512 = vpop.f32.mrf.mxu0
        %513 = vdwg.mxu0
        %v514 = vld [vmem:[#allocation8] sm:$0xf]
        %v515 = vld [vmem:[#allocation8 + $0x4] sm:$0xf]
        %v516 = vld [vmem:[#allocation8 + $0x8] sm:$0xf]
        %v517 = vld [vmem:[#allocation8 + $0xc] sm:$0xf]
        %v522 = vunpack.c.l.b16 %v514
        %v523 = vunpack.c.l.b16 %v515
        %v524 = vunpack.c.l.b16 %v516
        %v525 = vunpack.c.l.b16 %v517
        %v526 = vpack.c.b16 %v523, %v522
        %v527 = vpack.c.b16 %v525, %v524
        %530 = vmatprep.subr.bf16.mxu0 0
        %531 = vmatpush1.bf16.msra.mxu0 0
        %532 = vmatprep.subr.bf16.mxu0 0
        %533 = vmatpush1.bf16.msra.mxu0 0
        %534 = vmatprep.subr.bf16.mxu0 0
        %535 = vmatpush1.bf16.msra.mxu0 0
        %536 = vmatprep.subr.bf16.mxu0 0
        %537 = vmatpush1.bf16.msra.mxu0 0
        %538 = vmatprep.subr.bf16.mxu0 0
        %539 = vmatpush1.bf16.msra.mxu0 0
        %540 = vmatprep.subr.bf16.mxu0 0
        %541 = vmatpush1.bf16.msra.mxu0 0
        %542 = vmatprep.subr.bf16.mxu0 0
        %543 = vmatpush1.bf16.msra.mxu0 %v527
        %544 = vmatprep.subr.bf16.mxu0 0
        %545 = vmatpush1.bf16.msra.mxu0 %v526
        %546 = vmatprep.subr.bf16.mxu0 0
        %547 = vmatpush2.bf16.msra.mxu0 0
        %548 = vmatprep.subr.bf16.mxu0 0
        %549 = vmatpush2.bf16.msra.mxu0 0
        %550 = vmatprep.subr.bf16.mxu0 0
        %551 = vmatpush2.bf16.msra.mxu0 0
        %552 = vmatprep.subr.bf16.mxu0 0
        %553 = vmatpush2.bf16.msra.mxu0 0
        %554 = vmatprep.subr.bf16.mxu0 0
        %555 = vmatpush2.bf16.msra.mxu0 0
        %556 = vmatprep.subr.bf16.mxu0 0
        %557 = vmatpush2.bf16.msra.mxu0 0
        %558 = vmatprep.subr.bf16.mxu0 0
        %559 = vmatpush2.bf16.msra.mxu0 0
        %560 = vmatprep.subr.bf16.mxu0 0
        %561 = vmatpush2.bf16.msra.mxu0 0
        %562 = vmatprep.mubr.bf16.mxu0 0
        %563 = vmatmul.mubr.bf16.gmra.mxu0 %v415
        %v564 = vpop.f32.mrf.mxu0
        %v565 = vadd.f32 0.0, %v564
        %v566 = vpop.f32.mrf.mxu0
        %v567 = vpop.f32.mrf.mxu0
        %v568 = vpop.f32.mrf.mxu0
        %569 = vdwg.mxu0
        %v570 = vpack.c.bf16 %v457, %v457
        %vm571 = vcmask 60416
        %572 = vst.msk [vmem:[%s362] sm:$0xf] %vm571, %v570
        %v573 = vpack.c.bf16 %v509, %v509
        %574 = vst.msk [vmem:[%s369] sm:$0xf] %vm571, %v573
        %v575 = vpack.c.bf16 %v565, %v565
        %576 = vst.msk [vmem:[%s376] sm:$0xf] %vm571, %v575
        %v578 = vunpack.c.l.b16 %v570
        %v579 = vpack.c.b16 %v578, %v578
        %580 = vrot.lane.b32.xlu0 %v579, 120
        %v581 = vpop.permute.xlu0 %580
        %s583 = scalar_lea.vmem %s362, 4 [#allocation10]
        %584 = vst.msk [vmem:[%s583] sm:$0xf] %vm571, %v581
        %v586 = vunpack.c.l.b16 %v573
        %v587 = vpack.c.b16 %v586, %v586
        %588 = vrot.lane.b32.xlu0 %v587, 120
        %v589 = vpop.permute.xlu0 %588
        %s591 = scalar_lea.vmem %s369, 4 [#allocation11]
        %592 = vst.msk [vmem:[%s591] sm:$0xf] %vm571, %v589
        %v594 = vunpack.c.l.b16 %v575
        %v595 = vpack.c.b16 %v594, %v594
        %596 = vrot.lane.b32.xlu0 %v595, 120
        %v597 = vpop.permute.xlu0 %596
        %s599 = scalar_lea.vmem %s376, 4 [#allocation13]
        %600 = vst.msk [vmem:[%s599] sm:$0xf] %vm571, %v597
        %601 = vrot.lane.b32.xlu0 %v579, 112
        %v602 = vpop.permute.xlu0 %601
        %s604 = scalar_lea.vmem %s362, 8 [#allocation10]
        %605 = vst.msk [vmem:[%s604] sm:$0xf] %vm571, %v602
        %606 = vrot.lane.b32.xlu0 %v587, 112
        %v607 = vpop.permute.xlu0 %606
        %s609 = scalar_lea.vmem %s369, 8 [#allocation11]
        %610 = vst.msk [vmem:[%s609] sm:$0xf] %vm571, %v607
        %611 = vrot.lane.b32.xlu0 %v595, 112
        %v612 = vpop.permute.xlu0 %611
        %s614 = scalar_lea.vmem %s376, 8 [#allocation13]
        %615 = vst.msk [vmem:[%s614] sm:$0xf] %vm571, %v612
        %616 = vrot.lane.b32.xlu0 %v579, 104
        %v617 = vpop.permute.xlu0 %616
        %s619 = scalar_lea.vmem %s362, 12 [#allocation10]
        %620 = vst.msk [vmem:[%s619] sm:$0xf] %vm571, %v617
        %621 = vrot.lane.b32.xlu0 %v587, 104
        %v622 = vpop.permute.xlu0 %621
        %s624 = scalar_lea.vmem %s369, 12 [#allocation11]
        %625 = vst.msk [vmem:[%s624] sm:$0xf] %vm571, %v622
        %626 = vrot.lane.b32.xlu0 %v595, 104
        %v627 = vpop.permute.xlu0 %626
        %s629 = scalar_lea.vmem %s376, 12 [#allocation13]
        %630 = vst.msk [vmem:[%s629] sm:$0xf] %vm571, %v627
        %s631 = sand.u32 %s164, 1
        %s632 = scalar_lea.sflag [#allocation4], %s631
        %s633 = sand.u32 %s164, 1
        %s634 = smul.addr %s633, 16
        %s635 = scalar_lea.vmem [#allocation10], %s634
        %s636 = sand.u32 %s30, 1
        %s637 = scalar_lea.sflag [#allocation12], %s636
        %s638 = sand.u32 %s192, 1
        %s639 = smul.addr %s638, 16
        %s640 = scalar_lea.vmem [#allocation11], %s639
        %s641 = sand.u32 %s30, 1
        %s642 = scalar_lea.sflag [#allocation12], %s641
        %s643 = sand.u32 %s220, 1
        %s644 = smul.addr %s643, 16
        %s645 = scalar_lea.vmem [#allocation13], %s644
        // Predicated region
        $region57: #{tpu_custom_call.1} parent=39 // pred_check
          %p646 = pneg %p174
        $region58: #{tpu_custom_call.1} parent=39 // pred_check_branch
          %648 = sbr.rel (%p646) target = $region60
        $region59: #{tpu_custom_call.1} parent=39 // pred_region
          %s650 = ssub.s32 256, 256
          %651 = vsyncadd %s632, %s650
          %s652 = smul.addr %s34, 4
          %s653 = sadd.s32 %s35, %s652
          %s654 = smul.addr %s653, 64
          %s655 = scalar_lea.hbm %s5, %s654
          %s656 = sshll.u32 %s635, 4
          %s657 = int_to_ptr.vmem [resolvable:$true] %s656
          %662 = dma.vmem_to_hbm [thread:$0]  %s657, 256, %s655, %s632, 64, 64, 4
        $region60: #{tpu_custom_call.1} parent=39 // pred_fallthru
          _
        // Predicated region
        $region61: #{tpu_custom_call.1} parent=39 // pred_check
          %p663 = pneg %p202
        $region62: #{tpu_custom_call.1} parent=39 // pred_check_branch
          %665 = sbr.rel (%p663) target = $region64
        $region63: #{tpu_custom_call.1} parent=39 // pred_region
          %s667 = ssub.s32 256, 256
          %668 = vsyncadd %s637, %s667
          %s669 = smul.addr %s34, 4
          %s670 = sadd.s32 %s35, %s669
          %s671 = smul.addr %s670, 64
          %s672 = scalar_lea.hbm %s6, %s671
          %s673 = sshll.u32 %s640, 4
          %s674 = int_to_ptr.vmem [resolvable:$true] %s673
          %679 = dma.vmem_to_hbm [thread:$0]  %s674, 256, %s672, %s637, 64, 64, 4
        $region64: #{tpu_custom_call.1} parent=39 // pred_fallthru
          _
        // Predicated region
        $region65: #{tpu_custom_call.1} parent=39 // pred_check
          %p680 = pneg %p230
        $region66: #{tpu_custom_call.1} parent=39 // pred_check_branch
          %682 = sbr.rel (%p680) target = $region68
        $region67: #{tpu_custom_call.1} parent=39 // pred_region
          %s684 = ssub.s32 256, 256
          %685 = vsyncadd %s642, %s684
          %s686 = smul.addr %s34, 4
          %s687 = sadd.s32 %s35, %s686
          %s688 = smul.addr %s687, 64
          %s689 = scalar_lea.hbm %s7, %s688
          %s690 = sshll.u32 %s645, 4
          %s691 = int_to_ptr.vmem [resolvable:$true] %s690
          %696 = dma.vmem_to_hbm [thread:$0]  %s691, 256, %s689, %s642, 64, 64, 4
        $region68: #{tpu_custom_call.1} parent=39 // pred_fallthru
          _
      $region40: #{tpu_custom_call.1} parent=5 // pred_fallthru
        _
      %p697 = scmp.le.s32.totalorder 2, %s25
      // Predicated region
      $region69: #{tpu_custom_call.1} parent=5 // pred_check
        %p698 = pneg %p697
      $region70: #{tpu_custom_call.1} parent=5 // pred_check_branch
        %700 = sbr.rel (%p698) target = $region72
      $region71: #{tpu_custom_call.1} parent=5 // pred_region
        %s701 = ssub.s32 %s25, 2
        // Predicated region
        $region73: #{tpu_custom_call.1} parent=71 // pred_check
          %p702 = pneg %p180
        $region74: #{tpu_custom_call.1} parent=71 // pred_check_branch
          %704 = sbr.rel (%p702) target = $region76
        $region75: #{tpu_custom_call.1} parent=71 // pred_region
          %s705 = sand.u32 %s165, 1
          %s706 = scalar_lea.sflag [#allocation4], %s705
          %s707 = sand.u32 %s165, 1
          %s708 = smul.addr %s707, 16
          %s709 = scalar_lea.vmem [#allocation10], %s708
          %710 = dma.done %s706, 256
        $region76: #{tpu_custom_call.1} parent=71 // pred_fallthru
          _
        // Predicated region
        $region77: #{tpu_custom_call.1} parent=71 // pred_check
          %p711 = pneg %p208
        $region78: #{tpu_custom_call.1} parent=71 // pred_check_branch
          %713 = sbr.rel (%p711) target = $region80
        $region79: #{tpu_custom_call.1} parent=71 // pred_region
          %s714 = sand.u32 %s31, 1
          %s715 = scalar_lea.sflag [#allocation12], %s714
          %s716 = sand.u32 %s193, 1
          %s717 = smul.addr %s716, 16
          %s718 = scalar_lea.vmem [#allocation11], %s717
          %719 = dma.done %s715, 256
        $region80: #{tpu_custom_call.1} parent=71 // pred_fallthru
          _
        // Predicated region
        $region81: #{tpu_custom_call.1} parent=71 // pred_check
          %p720 = pneg %p236
        $region82: #{tpu_custom_call.1} parent=71 // pred_check_branch
          %722 = sbr.rel (%p720) target = $region84
        $region83: #{tpu_custom_call.1} parent=71 // pred_region
          %s723 = sand.u32 %s31, 1
          %s724 = scalar_lea.sflag [#allocation12], %s723
          %s725 = sand.u32 %s221, 1
          %s726 = smul.addr %s725, 16
          %s727 = scalar_lea.vmem [#allocation13], %s726
          %728 = dma.done %s724, 256
        $region84: #{tpu_custom_call.1} parent=71 // pred_fallthru
          _
      $region72: #{tpu_custom_call.1} parent=5 // pred_fallthru
        _
    $region6: #{tpu_custom_call.1} parent=1 // loop_footer
      %s29 = sadd.s32 1, %s25
    $region7: #{tpu_custom_call.1} parent=1 // loop_footer_branch
      %24 = sbr.rel target = $region3
    $region8: #{tpu_custom_call.1} parent=1 // loop_exit
      _
    %729 = vsyncpa [#allocation3], 1
    %s730 = scalar_lea.sflag [#allocation3], 1
    %731 = vsyncpa %s730, 1
    %732 = vsyncpa [#allocation6], 1
    %733 = vsyncpa [#allocation9], 1
    %734 = vsyncpa [#allocation4], 1
    %s735 = scalar_lea.sflag [#allocation4], 1
    %736 = vsyncpa %s735, 1
    %737 = vsyncpa [#allocation12], 1
    %s738 = scalar_lea.sflag [#allocation12], 1
    %739 = vsyncpa %s738, 1

</llo_original>
